<compile_context>
chip_gen: v5e
topology: v5e:2x2
jax: 0.10.0
libtpu: 0.0.40
codegen_flags: <defaults>
</compile_context>

<pallas_src>
import functools

import numpy as np
import jax
import jax.numpy as jnp
from jax.experimental import pallas as pl
from jax.experimental.pallas import tpu as pltpu


# ---------------------------------------------------------------------------
# Autoregressive mask construction (exact port of create_masks, 'sequential')
# ---------------------------------------------------------------------------
def create_masks(input_size, hidden_size, n_hidden, input_degrees=None):
    degrees = []
    if input_degrees is None:
        degrees.append(np.arange(input_size))
    else:
        degrees.append(np.asarray(input_degrees))
    for _ in range(n_hidden + 1):
        degrees.append(np.arange(hidden_size) % (input_size - 1))
    if input_degrees is None:
        degrees.append(np.arange(input_size) % input_size - 1)
    else:
        degrees.append(np.asarray(input_degrees) % input_size - 1)

    masks = []
    for d0, d1 in zip(degrees[:-1], degrees[1:]):
        # mask shape (out_features, in_features), same as torch weight layout
        masks.append((d1[:, None] >= d0[None, :]).astype(np.float32))
    return masks, degrees[0]


def _round_up(x, m):
    return ((x + m - 1) // m) * m


# ---------------------------------------------------------------------------
# Pallas kernel: fused stack of MADE blocks (n_blocks == 1 -> MADE.forward)
# ---------------------------------------------------------------------------
def _made_stack_kernel(n_blocks, n_hidden, d, x_ref, *refs):
    # refs layout: per block [w0, b0, (wh, bh) * n_hidden, w_out, b_out], then out_ref
    per_block = 2 * (n_hidden + 2)
    out_ref = refs[n_blocks * per_block]

    x = x_ref[...]                                   # (TB, D) f32
    u = x
    sum_nladj = jnp.zeros_like(x)

    for blk in range(n_blocks):
        base = blk * per_block
        w0 = refs[base][...]
        b0 = refs[base + 1][...]
        h = jnp.dot(u.astype(w0.dtype), w0,
                    preferred_element_type=jnp.float32) + b0.astype(jnp.float32)
        for l in range(n_hidden):
            wh = refs[base + 2 + 2 * l][...]
            bh = refs[base + 3 + 2 * l][...]
            h = jnp.maximum(h, 0.0)                                  # ReLU
            h = jnp.dot(h.astype(wh.dtype), wh,
                        preferred_element_type=jnp.float32) + bh.astype(jnp.float32)
        w_out = refs[base + per_block - 2][...]                      # (H, 2D) merged
        b_out = refs[base + per_block - 1][...]                      # (1, 2D)
        h = jnp.maximum(h, 0.0)                                      # ReLU
        mo = jnp.dot(h.astype(w_out.dtype), w_out,
                     preferred_element_type=jnp.float32) + b_out.astype(jnp.float32)
        m = mo[:, :d]
        loga = mo[:, d:]
        u = (u - m) * jnp.exp(-loga)                                 # f32 VPU/EUP tail
        sum_nladj = sum_nladj - loga                                 # log|det J| accum

    # single lane-concatenated store: [ u | sum log|det J| ]  -> (TB, 2D)
    out_ref[...] = jnp.concatenate([u, sum_nladj], axis=1).astype(out_ref.dtype)


def made_stack_forward(x, block_params, n_hidden, *, batch_tile=512):
    """Fused forward through a stack of MADE blocks. Returns (u, sum_log_abs_det_jacobian)."""
    B, D = x.shape
    n_blocks = len(block_params)
    flat = [p for blk in block_params for p in blk]
    hidden = int(block_params[0][0].shape[1])

    # Batch tile: as large as reasonable, multiple of 8 sublanes; pad B up to it.
    TB = int(min(batch_tile, _round_up(B, 8)))
    B_pad = _round_up(B, TB)
    x_p = x if B_pad == B else jnp.pad(x, ((0, B_pad - B), (0, 0)))

    grid = (B_pad // TB,)

    x_spec = pl.BlockSpec((TB, D), lambda i: (i, 0))
    w_specs = [pl.BlockSpec(p.shape, lambda i: (0, 0)) for p in flat]   # VMEM-resident
    out_spec = pl.BlockSpec((TB, 2 * D), lambda i: (i, 0))

    weight_bytes = sum(int(np.prod(p.shape)) * p.dtype.itemsize for p in flat)
    flops = 2 * B_pad * n_blocks * (D * hidden + n_hidden * hidden * hidden + hidden * 2 * D)
    cost = pl.CostEstimate(
        flops=int(flops),
        transcendentals=int(B_pad * D * n_blocks),
        bytes_accessed=int(weight_bytes + B_pad * D * 4 + B_pad * 2 * D * 4),
    )
    # VMEM budget: resident weights + double-buffered in/out tiles + activation headroom.
    vmem_bytes = (weight_bytes
                  + 2 * 2 * (TB * D * 4 + TB * 2 * D * 4)
                  + 8 * TB * max(hidden, 2 * D) * 4
                  + (2 << 20))
    vmem_limit = int(min(max(vmem_bytes, 16 << 20), 100 << 20))

    kernel = functools.partial(_made_stack_kernel, n_blocks, n_hidden, D)
    out = pl.pallas_call(
        kernel,
        grid=grid,
        out_shape=jax.ShapeDtypeStruct((B_pad, 2 * D), x.dtype),
        in_specs=[x_spec] + w_specs,
        out_specs=out_spec,
        compiler_params=pltpu.CompilerParams(
            dimension_semantics=("parallel",),   # megacore sharding on v7x
            vmem_limit_bytes=vmem_limit,
        ),
        cost_estimate=cost,
    )(x_p, *flat)

    u = out[:B, :D]
    sum_nladj = out[:B, D:]
    return u, sum_nladj


def made_forward(x, params, n_hidden):
    """Exact MADE.forward semantics: returns (u, log_abs_det_jacobian)."""
    return made_stack_forward(x, [params], n_hidden)


# ---------------------------------------------------------------------------
# Parameter construction (deterministic, mimics nn.Linear init + MaskedLinear)
# ---------------------------------------------------------------------------
def _linear_init(key, fan_in, fan_out):
    k = 1.0 / np.sqrt(fan_in)
    kw, kb = jax.random.split(key)
    w = jax.random.uniform(kw, (fan_out, fan_in), jnp.float32, -k, k)  # torch layout (out, in)
    b = jax.random.uniform(kb, (fan_out,), jnp.float32, -k, k)
    return w, b


def build_made_stack_params(key, n_blocks, input_size, hidden_size, n_hidden,
                            dtype=jnp.float32):
    """Per-block pre-masked, transposed weights.  Output layer is merged into a
    single (hidden, 2*input_size) weight producing [m | loga].
    dtype=jnp.bfloat16 halves weight DMA bytes / VMEM residency (MXU-native)."""
    blocks = []
    input_degrees = None
    for _ in range(n_blocks):
        masks, in_deg = create_masks(input_size, hidden_size, n_hidden, input_degrees)
        input_degrees = in_deg[::-1].copy()  # .flip(0) for the next stacked block

        params = []
        key, sk = jax.random.split(key)
        w, b = _linear_init(sk, input_size, hidden_size)
        params += [(w * jnp.asarray(masks[0])).T.astype(dtype),
                   b.reshape(1, -1).astype(dtype)]
        for m in masks[1:-1]:
            key, sk = jax.random.split(key)
            w, b = _linear_init(sk, hidden_size, hidden_size)
            params += [(w * jnp.asarray(m)).T.astype(dtype),
                       b.reshape(1, -1).astype(dtype)]
        key, sk = jax.random.split(key)
        w, b = _linear_init(sk, hidden_size, 2 * input_size)
        out_mask = jnp.asarray(np.tile(masks[-1], (2, 1)))   # mask.repeat(2, 1)
        params += [(w * out_mask).T.astype(dtype),           # (H, 2D): [m | loga]
                   b.reshape(1, -1).astype(dtype)]
        blocks.append(params)
    return blocks


# ---------------------------------------------------------------------------
# Pure-JAX reference (same math, no Pallas) for correctness checks
# ---------------------------------------------------------------------------
def made_stack_forward_ref(x, block_params, n_hidden):
    D = x.shape[1]
    u = x
    sum_nladj = jnp.zeros_like(x)
    for params in block_params:
        w0, b0 = params[0], params[1]
        h = u.astype(w0.dtype) @ w0 + b0
        h = h.astype(jnp.float32)
        for l in range(n_hidden):
            wh, bh = params[2 + 2 * l], params[3 + 2 * l]
            h = jnp.maximum(h, 0.0).astype(wh.dtype) @ wh + bh
            h = h.astype(jnp.float32)
        w_out, b_out = params[-2], params[-1]
        mo = (jnp.maximum(h, 0.0).astype(w_out.dtype) @ w_out + b_out).astype(jnp.float32)
        m, loga = mo[:, :D], mo[:, D:]
        u = (u - m) * jnp.exp(-loga)
        sum_nladj = sum_nladj - loga
    return u, sum_nladj


if __name__ == "__main__":
    # Small config consistent with MADE(input_size, hidden_size, n_hidden)
    n_blocks, input_size, hidden_size, n_hidden = 2, 4, 32, 2
    batch = 2

    key = jax.random.PRNGKey(0)
    key, kx = jax.random.split(key)
    x = jax.random.normal(kx, (batch, input_size), jnp.float32)

    block_params = build_made_stack_params(key, n_blocks, input_size, hidden_size,
                                           n_hidden, dtype=jnp.float32)

    # --- single MADE block: exact MADE.forward semantics ---------------------
    u1, ladj1 = made_forward(x, block_params[0], n_hidden)
    u1, ladj1 = jax.block_until_ready(u1), jax.block_until_ready(ladj1)
    u1_ref, ladj1_ref = made_stack_forward_ref(x, block_params[:1], n_hidden)
    assert u1.shape == (batch, input_size) and ladj1.shape == (batch, input_size)
    np.testing.assert_allclose(np.asarray(u1), np.asarray(u1_ref), rtol=5e-3, atol=5e-3)
    np.testing.assert_allclose(np.asarray(ladj1), np.asarray(ladj1_ref), rtol=5e-3, atol=5e-3)

    # --- fused stack of MADE blocks (single pallas_call) ---------------------
    u, sum_ladj = made_stack_forward(x, block_params, n_hidden)
    u, sum_ladj = jax.block_until_ready(u), jax.block_until_ready(sum_ladj)
    u_ref, ladj_ref = made_stack_forward_ref(x, block_params, n_hidden)
    assert u.shape == (batch, input_size) and sum_ladj.shape == (batch, input_size)
    np.testing.assert_allclose(np.asarray(u), np.asarray(u_ref), rtol=5e-3, atol=5e-3)
    np.testing.assert_allclose(np.asarray(sum_ladj), np.asarray(ladj_ref), rtol=5e-3, atol=5e-3)

    # TODO(synk): MADE.inverse (sequential data-dependent per-dimension loop) and
    # base_dist/log_prob are not kernelized here; forward only.
    print("KERNEL_OK")
</pallas_src>

<mosaic_0001>
module attributes {stable_mosaic.version = 11 : i64} {
  func.func @_made_stack_kernel(%arg0: i32, %arg1: memref<8x4xf32, #tpu.memory_space<vmem>>, %arg2: memref<4x32xf32, #tpu.memory_space<vmem>>, %arg3: memref<1x32xf32, #tpu.memory_space<vmem>>, %arg4: memref<32x32xf32, #tpu.memory_space<vmem>>, %arg5: memref<1x32xf32, #tpu.memory_space<vmem>>, %arg6: memref<32x32xf32, #tpu.memory_space<vmem>>, %arg7: memref<1x32xf32, #tpu.memory_space<vmem>>, %arg8: memref<32x8xf32, #tpu.memory_space<vmem>>, %arg9: memref<1x8xf32, #tpu.memory_space<vmem>>, %arg10: memref<8x8xf32, #tpu.memory_space<vmem>>) attributes {dimension_semantics = [#tpu.dimension_semantics<parallel>], iteration_bounds = array<i64: 1>, scalar_prefetch = 0 : i64, scratch_operands = 0 : i64, tpu.core_type = #tpu.core_type<tc>, window_params = [{transform_indices = @transform_0, window_bounds = array<i64: 8, 4>}, {pipeline_mode = #tpu.pipeline_mode<synchronous>, transform_indices = @transform_1, window_bounds = array<i64: 4, 32>}, {pipeline_mode = #tpu.pipeline_mode<synchronous>, transform_indices = @transform_2, window_bounds = array<i64: 1, 32>}, {pipeline_mode = #tpu.pipeline_mode<synchronous>, transform_indices = @transform_3, window_bounds = array<i64: 32, 32>}, {pipeline_mode = #tpu.pipeline_mode<synchronous>, transform_indices = @transform_4, window_bounds = array<i64: 1, 32>}, {pipeline_mode = #tpu.pipeline_mode<synchronous>, transform_indices = @transform_5, window_bounds = array<i64: 32, 32>}, {pipeline_mode = #tpu.pipeline_mode<synchronous>, transform_indices = @transform_6, window_bounds = array<i64: 1, 32>}, {pipeline_mode = #tpu.pipeline_mode<synchronous>, transform_indices = @transform_7, window_bounds = array<i64: 32, 8>}, {pipeline_mode = #tpu.pipeline_mode<synchronous>, transform_indices = @transform_8, window_bounds = array<i64: 1, 8>}, {transform_indices = @transform_9, window_bounds = array<i64: 8, 8>}]} {
    %c0 = arith.constant 0 : index
    %c0_0 = arith.constant 0 : index
    %0 = vector.load %arg1[%c0, %c0_0] : memref<8x4xf32, #tpu.memory_space<vmem>>, vector<8x4xf32>
    %cst = arith.constant 0.000000e+00 : f32
    %1 = vector.broadcast %cst : f32 to vector<8x4xf32>
    %c0_1 = arith.constant 0 : index
    %c0_2 = arith.constant 0 : index
    %2 = vector.load %arg2[%c0_1, %c0_2] : memref<4x32xf32, #tpu.memory_space<vmem>>, vector<4x32xf32>
    %c0_3 = arith.constant 0 : index
    %c0_4 = arith.constant 0 : index
    %3 = vector.load %arg3[%c0_3, %c0_4] : memref<1x32xf32, #tpu.memory_space<vmem>>, vector<1x32xf32>
    %cst_5 = arith.constant dense<0.000000e+00> : vector<8x32xf32>
    %4 = tpu.matmul %0, %2, %cst_5 {dimension_numbers = #tpu.dot_dimension_numbers<[1], [0], [0], [1], [0, 0, 1, 1], [], []>} : vector<8x4xf32>, vector<4x32xf32>, vector<8x32xf32> -> vector<8x32xf32>
    %5 = vector.broadcast %3 : vector<1x32xf32> to vector<8x32xf32>
    %6 = arith.addf %4, %5 : vector<8x32xf32>
    %c0_6 = arith.constant 0 : index
    %c0_7 = arith.constant 0 : index
    %7 = vector.load %arg4[%c0_6, %c0_7] : memref<32x32xf32, #tpu.memory_space<vmem>>, vector<32x32xf32>
    %c0_8 = arith.constant 0 : index
    %c0_9 = arith.constant 0 : index
    %8 = vector.load %arg5[%c0_8, %c0_9] : memref<1x32xf32, #tpu.memory_space<vmem>>, vector<1x32xf32>
    %cst_10 = arith.constant 0.000000e+00 : f32
    %9 = vector.broadcast %cst_10 : f32 to vector<8x32xf32>
    %10 = arith.maximumf %6, %9 : vector<8x32xf32>
    %cst_11 = arith.constant dense<0.000000e+00> : vector<8x32xf32>
    %11 = tpu.matmul %10, %7, %cst_11 {dimension_numbers = #tpu.dot_dimension_numbers<[1], [0], [0], [1], [0, 0, 1, 1], [], []>} : vector<8x32xf32>, vector<32x32xf32>, vector<8x32xf32> -> vector<8x32xf32>
    %12 = vector.broadcast %8 : vector<1x32xf32> to vector<8x32xf32>
    %13 = arith.addf %11, %12 : vector<8x32xf32>
    %c0_12 = arith.constant 0 : index
    %c0_13 = arith.constant 0 : index
    %14 = vector.load %arg6[%c0_12, %c0_13] : memref<32x32xf32, #tpu.memory_space<vmem>>, vector<32x32xf32>
    %c0_14 = arith.constant 0 : index
    %c0_15 = arith.constant 0 : index
    %15 = vector.load %arg7[%c0_14, %c0_15] : memref<1x32xf32, #tpu.memory_space<vmem>>, vector<1x32xf32>
    %cst_16 = arith.constant 0.000000e+00 : f32
    %16 = vector.broadcast %cst_16 : f32 to vector<8x32xf32>
    %17 = arith.maximumf %13, %16 : vector<8x32xf32>
    %cst_17 = arith.constant dense<0.000000e+00> : vector<8x32xf32>
    %18 = tpu.matmul %17, %14, %cst_17 {dimension_numbers = #tpu.dot_dimension_numbers<[1], [0], [0], [1], [0, 0, 1, 1], [], []>} : vector<8x32xf32>, vector<32x32xf32>, vector<8x32xf32> -> vector<8x32xf32>
    %19 = vector.broadcast %15 : vector<1x32xf32> to vector<8x32xf32>
    %20 = arith.addf %18, %19 : vector<8x32xf32>
    %c0_18 = arith.constant 0 : index
    %c0_19 = arith.constant 0 : index
    %21 = vector.load %arg8[%c0_18, %c0_19] : memref<32x8xf32, #tpu.memory_space<vmem>>, vector<32x8xf32>
    %c0_20 = arith.constant 0 : index
    %c0_21 = arith.constant 0 : index
    %22 = vector.load %arg9[%c0_20, %c0_21] : memref<1x8xf32, #tpu.memory_space<vmem>>, vector<1x8xf32>
    %cst_22 = arith.constant 0.000000e+00 : f32
    %23 = vector.broadcast %cst_22 : f32 to vector<8x32xf32>
    %24 = arith.maximumf %20, %23 : vector<8x32xf32>
    %cst_23 = arith.constant dense<0.000000e+00> : vector<8x8xf32>
    %25 = tpu.matmul %24, %21, %cst_23 {dimension_numbers = #tpu.dot_dimension_numbers<[1], [0], [0], [1], [0, 0, 1, 1], [], []>} : vector<8x32xf32>, vector<32x8xf32>, vector<8x8xf32> -> vector<8x8xf32>
    %26 = vector.broadcast %22 : vector<1x8xf32> to vector<8x8xf32>
    %27 = arith.addf %25, %26 : vector<8x8xf32>
    %28 = vector.extract_strided_slice %27 {offsets = [0, 0], sizes = [8, 4], strides = [1, 1]} : vector<8x8xf32> to vector<8x4xf32>
    %29 = vector.extract_strided_slice %27 {offsets = [0, 4], sizes = [8, 4], strides = [1, 1]} : vector<8x8xf32> to vector<8x4xf32>
    %30 = arith.subf %0, %28 : vector<8x4xf32>
    %cst_24 = arith.constant 0.000000e+00 : f32
    %31 = vector.broadcast %cst_24 : f32 to vector<8x4xf32>
    %32 = arith.subf %31, %29 : vector<8x4xf32>
    %33 = math.exp %32 : vector<8x4xf32>
    %34 = arith.mulf %30, %33 : vector<8x4xf32>
    %35 = arith.subf %1, %29 : vector<8x4xf32>
    %36 = tpu.concatenate %34, %35 in 1 : vector<8x4xf32>, vector<8x4xf32> -> vector<8x8xf32>
    %c0_25 = arith.constant 0 : index
    %c0_26 = arith.constant 0 : index
    %37 = vector.load %arg10[%c0_25, %c0_26] : memref<8x8xf32, #tpu.memory_space<vmem>>, vector<8x8xf32>
    tpu.vector_store %arg10[%c0_25, %c0_26], %36 {strides = array<i32>} : memref<8x8xf32, #tpu.memory_space<vmem>>, vector<8x8xf32>,
    return
  }
  func.func @transform_0(%arg0: i32) -> (i32, i32) {
    %c0_i32 = arith.constant 0 : i32
    %c0_i32_0 = arith.constant 0 : i32
    return %arg0, %c0_i32 : i32, i32
  }
  func.func @transform_1(%arg0: i32) -> (i32, i32) {
    %c0_i32 = arith.constant 0 : i32
    %c0_i32_0 = arith.constant 0 : i32
    %c0_i32_1 = arith.constant 0 : i32
    return %c0_i32, %c0_i32_0 : i32, i32
  }
  func.func @transform_2(%arg0: i32) -> (i32, i32) {
    %c0_i32 = arith.constant 0 : i32
    %c0_i32_0 = arith.constant 0 : i32
    %c0_i32_1 = arith.constant 0 : i32
    return %c0_i32, %c0_i32_0 : i32, i32
  }
  func.func @transform_3(%arg0: i32) -> (i32, i32) {
    %c0_i32 = arith.constant 0 : i32
    %c0_i32_0 = arith.constant 0 : i32
    %c0_i32_1 = arith.constant 0 : i32
    return %c0_i32, %c0_i32_0 : i32, i32
  }
  func.func @transform_4(%arg0: i32) -> (i32, i32) {
    %c0_i32 = arith.constant 0 : i32
    %c0_i32_0 = arith.constant 0 : i32
    %c0_i32_1 = arith.constant 0 : i32
    return %c0_i32, %c0_i32_0 : i32, i32
  }
  func.func @transform_5(%arg0: i32) -> (i32, i32) {
    %c0_i32 = arith.constant 0 : i32
    %c0_i32_0 = arith.constant 0 : i32
    %c0_i32_1 = arith.constant 0 : i32
    return %c0_i32, %c0_i32_0 : i32, i32
  }
  func.func @transform_6(%arg0: i32) -> (i32, i32) {
    %c0_i32 = arith.constant 0 : i32
    %c0_i32_0 = arith.constant 0 : i32
    %c0_i32_1 = arith.constant 0 : i32
    return %c0_i32, %c0_i32_0 : i32, i32
  }
  func.func @transform_7(%arg0: i32) -> (i32, i32) {
    %c0_i32 = arith.constant 0 : i32
    %c0_i32_0 = arith.constant 0 : i32
    %c0_i32_1 = arith.constant 0 : i32
    return %c0_i32, %c0_i32_0 : i32, i32
  }
  func.func @transform_8(%arg0: i32) -> (i32, i32) {
    %c0_i32 = arith.constant 0 : i32
    %c0_i32_0 = arith.constant 0 : i32
    %c0_i32_1 = arith.constant 0 : i32
    return %c0_i32, %c0_i32_0 : i32, i32
  }
  func.func @transform_9(%arg0: i32) -> (i32, i32) {
    %c0_i32 = arith.constant 0 : i32
    %c0_i32_0 = arith.constant 0 : i32
    return %arg0, %c0_i32 : i32, i32
  }
}

</mosaic_0001>

<llo_original>
// kernel: tpu_custom_call.1
$region0: #{tpu_custom_call.1}
  #allocation0 [shape = 'u32[]', space=smem, size = 0x4, offset = 0x4, fixed_abs, tag = 'smem constant byte address 0x4 - core index']
  #allocation1 [shape = 'u32[72,128]{1,0:T(1,128)}', space=vmem, size = 0x9000, scoped, tag = 'internal scratch']
  %s0 = inlined_call_operand.vmem [shape: f32[8,4], index: 0, kind: input, shape index: {}]
  %s1 = inlined_call_operand.vmem [shape: f32[4,32], index: 1, kind: input, shape index: {}]
  %s2 = inlined_call_operand.vmem [shape: f32[1,32], index: 2, kind: input, shape index: {}]
  %s3 = inlined_call_operand.vmem [shape: f32[32,32], index: 3, kind: input, shape index: {}]
  %s4 = inlined_call_operand.vmem [shape: f32[1,32], index: 4, kind: input, shape index: {}]
  %s5 = inlined_call_operand.hbm [shape: f32[32,32], index: 5, kind: input, shape index: {}]
  %s6 = inlined_call_operand.vmem [shape: f32[1,32], index: 6, kind: input, shape index: {}]
  %s7 = inlined_call_operand.vmem [shape: f32[32,8], index: 7, kind: input, shape index: {}]
  %s8 = inlined_call_operand.vmem [shape: f32[1,8], index: 8, kind: input, shape index: {}]
  %s9 = inlined_call_operand.hbm [shape: f32[8,8], index: 9, kind: output, shape index: {}]
  %s10 = sld [smem:[#allocation0]]
  $region50: #{tpu_custom_call.1} parent=0
    _
  %s12 = ssub.s32 1, %s10
  %s13 = scalar_select 0, %s12, %s10
  $region1: #{tpu_custom_call.1} parent=0
    #allocation2 [shape = 'u8[16384]{0}', space=vmem, size = 0x4000, scoped, tag = 'input window, operand 5, single buffered']
    #allocation3 [shape = 's32[1]{0}', space=sflag, size = 0x4, scoped, tag = 'scoped memory for tpu_custom_call.1']
    #allocation4 [shape = 's32[1]{0}', space=sflag, size = 0x4, scoped, tag = 'scoped memory for tpu_custom_call.1']
    #allocation5 [shape = 'u8[4096]{0}', space=vmem, size = 0x1000, scoped, tag = 'output window, operand 0, single buffered']
    %14 = vsyncpa [#allocation3], 0
    %15 = vsyncpa [#allocation4], 0
    // Predicated region
    $region2: #{tpu_custom_call.1} parent=1 // pred_check
      _
    $region3: #{tpu_custom_call.1} parent=1 // pred_check_branch
      %17 = sbr.rel (0) target = $region5
    $region4: #{tpu_custom_call.1} parent=1 // pred_region
      _
    $region5: #{tpu_custom_call.1} parent=1 // pred_fallthru
      _
    // Predicated region
    $region6: #{tpu_custom_call.1} parent=1 // pred_check
      _
    $region7: #{tpu_custom_call.1} parent=1 // pred_check_branch
      %19 = sbr.rel (0) target = $region9
    $region8: #{tpu_custom_call.1} parent=1 // pred_region
      _
    $region9: #{tpu_custom_call.1} parent=1 // pred_fallthru
      _
    // Predicated region
    $region10: #{tpu_custom_call.1} parent=1 // pred_check
      _
    $region11: #{tpu_custom_call.1} parent=1 // pred_check_branch
      %21 = sbr.rel (0) target = $region13
    $region12: #{tpu_custom_call.1} parent=1 // pred_region
      _
    $region13: #{tpu_custom_call.1} parent=1 // pred_fallthru
      _
    // Predicated region
    $region14: #{tpu_custom_call.1} parent=1 // pred_check
      _
    $region15: #{tpu_custom_call.1} parent=1 // pred_check_branch
      %23 = sbr.rel (0) target = $region17
    $region16: #{tpu_custom_call.1} parent=1 // pred_region
      _
    $region17: #{tpu_custom_call.1} parent=1 // pred_fallthru
      _
    // Predicated region
    $region18: #{tpu_custom_call.1} parent=1 // pred_check
      _
    $region19: #{tpu_custom_call.1} parent=1 // pred_check_branch
      %25 = sbr.rel (0) target = $region21
    $region20: #{tpu_custom_call.1} parent=1 // pred_region
      _
    $region21: #{tpu_custom_call.1} parent=1 // pred_fallthru
      _
    // Predicated region
    $region22: #{tpu_custom_call.1} parent=1 // pred_check
      _
    $region23: #{tpu_custom_call.1} parent=1 // pred_check_branch
      %27 = sbr.rel (0) target = $region25
    $region24: #{tpu_custom_call.1} parent=1 // pred_region
      %29 = vsyncadd [#allocation3], 0
      %s30 = sshll.u32 %s5, 4
      %s31 = int_to_ptr.hbm [resolvable:$true] %s30
      %s32 = sshll.u32 [#allocation2], 4
      %s33 = int_to_ptr.vmem [resolvable:$true] %s32
      %38 = dma.hbm_to_vmem [thread:$0]  %s31, 512, %s33, [#allocation3], 128, 128, 8
    $region25: #{tpu_custom_call.1} parent=1 // pred_fallthru
      _
    // Predicated region
    $region26: #{tpu_custom_call.1} parent=1 // pred_check
      _
    $region27: #{tpu_custom_call.1} parent=1 // pred_check_branch
      %40 = sbr.rel (0) target = $region29
    $region28: #{tpu_custom_call.1} parent=1 // pred_region
      _
    $region29: #{tpu_custom_call.1} parent=1 // pred_fallthru
      _
    // Predicated region
    $region30: #{tpu_custom_call.1} parent=1 // pred_check
      _
    $region31: #{tpu_custom_call.1} parent=1 // pred_check_branch
      %42 = sbr.rel (0) target = $region33
    $region32: #{tpu_custom_call.1} parent=1 // pred_region
      _
    $region33: #{tpu_custom_call.1} parent=1 // pred_fallthru
      _
    // Predicated region
    $region34: #{tpu_custom_call.1} parent=1 // pred_check
      _
    $region35: #{tpu_custom_call.1} parent=1 // pred_check_branch
      %44 = sbr.rel (0) target = $region37
    $region36: #{tpu_custom_call.1} parent=1 // pred_region
      _
    $region37: #{tpu_custom_call.1} parent=1 // pred_fallthru
      _
    // Predicated region
    $region38: #{tpu_custom_call.1} parent=1 // pred_check
      _
    $region39: #{tpu_custom_call.1} parent=1 // pred_check_branch
      %46 = sbr.rel (0) target = $region41
    $region40: #{tpu_custom_call.1} parent=1 // pred_region
      %48 = dma.done [#allocation3], 512
    $region41: #{tpu_custom_call.1} parent=1 // pred_fallthru
      _
    %v49 = vld [vmem:[%s0] sm:$0xff]
    %v50 = vld [vmem:[%s1] sm:$0xf]
    %v51 = vld [vmem:[%s2] sm:$0x1]
    %v53 = vperm.slane %v51, 0
    %vm55 = vcmask 31744
    %v57 = vsel %vm55, %v49, 0
    %vm59 = vcmask 1043456
    %v61 = vsel %vm59, %v50, 0
    %63 = vmatpush.msra.mxu0 0.0
    %64 = vmatpush.msra.mxu0 0.0
    %65 = vmatpush.msra.mxu0 0.0
    %66 = vmatpush.msra.mxu0 0.0
    %67 = vmatpush.msra.mxu0 0.0
    %68 = vmatpush.msra.mxu0 0.0
    %69 = vmatpush.msra.mxu0 0.0
    %70 = vmatpush.msra.mxu0 0.0
    %71 = vmatpush.msra.mxu0 0.0
    %72 = vmatpush.msra.mxu0 0.0
    %73 = vmatpush.msra.mxu0 0.0
    %74 = vmatpush.msra.mxu0 0.0
    %75 = vmatpush.msra.mxu0 0.0
    %76 = vmatpush.msra.mxu0 0.0
    %77 = vmatpush.msra.mxu0 0.0
    %78 = vmatpush.msra.mxu0 %v61
    %79 = vmatmul.f32.gmra.mxu0 %v57
    %v80 = vpop.f32.mrf.mxu0
    %v81 = vadd.f32 %v53, %v80
    %82 = vdwg.mxu0
    %v83 = vld [vmem:[%s3] sm:$0xff]
    %v84 = vld [vmem:[%s3 + $0x8] sm:$0xff]
    %v85 = vld [vmem:[%s3 + $0x10] sm:$0xff]
    %v86 = vld [vmem:[%s3 + $0x18] sm:$0xff]
    %v87 = vld [vmem:[%s4] sm:$0x1]
    %v88 = vmax.f32 %v81, 0.0
    %v90 = vperm.slane %v87, 0
    %vm92 = vcmask 261120
    %v94 = vsel %vm92, %v88, 0
    %96 = vmatpush.msra.mxu0 0.0
    %97 = vmatpush.msra.mxu0 0.0
    %98 = vmatpush.msra.mxu0 0.0
    %99 = vmatpush.msra.mxu0 0.0
    %100 = vmatpush.msra.mxu0 0.0
    %101 = vmatpush.msra.mxu0 0.0
    %102 = vmatpush.msra.mxu0 0.0
    %103 = vmatpush.msra.mxu0 0.0
    %104 = vmatpush.msra.mxu0 0.0
    %105 = vmatpush.msra.mxu0 0.0
    %106 = vmatpush.msra.mxu0 0.0
    %107 = vmatpush.msra.mxu0 0.0
    %108 = vmatpush.msra.mxu0 %v86
    %109 = vmatpush.msra.mxu0 %v85
    %110 = vmatpush.msra.mxu0 %v84
    %111 = vmatpush.msra.mxu0 %v83
    %112 = vmatmul.f32.gmra.mxu0 %v94
    %v113 = vpop.f32.mrf.mxu0
    %v114 = vadd.f32 %v90, %v113
    %115 = vdwg.mxu0
    %v116 = vld [vmem:[#allocation2] sm:$0xff]
    %v117 = vld [vmem:[#allocation2 + $0x8] sm:$0xff]
    %v118 = vld [vmem:[#allocation2 + $0x10] sm:$0xff]
    %v119 = vld [vmem:[#allocation2 + $0x18] sm:$0xff]
    %v120 = vld [vmem:[%s6] sm:$0x1]
    %v121 = vmax.f32 %v114, 0.0
    %v123 = vperm.slane %v120, 0
    %v126 = vsel %vm92, %v121, 0
    %128 = vmatpush.msra.mxu0 0.0
    %129 = vmatpush.msra.mxu0 0.0
    %130 = vmatpush.msra.mxu0 0.0
    %131 = vmatpush.msra.mxu0 0.0
    %132 = vmatpush.msra.mxu0 0.0
    %133 = vmatpush.msra.mxu0 0.0
    %134 = vmatpush.msra.mxu0 0.0
    %135 = vmatpush.msra.mxu0 0.0
    %136 = vmatpush.msra.mxu0 0.0
    %137 = vmatpush.msra.mxu0 0.0
    %138 = vmatpush.msra.mxu0 0.0
    %139 = vmatpush.msra.mxu0 0.0
    %140 = vmatpush.msra.mxu0 %v119
    %141 = vmatpush.msra.mxu0 %v118
    %142 = vmatpush.msra.mxu0 %v117
    %143 = vmatpush.msra.mxu0 %v116
    %144 = vmatmul.f32.gmra.mxu0 %v126
    %v145 = vpop.f32.mrf.mxu0
    %v146 = vadd.f32 %v123, %v145
    %147 = vdwg.mxu0
    %v148 = vld [vmem:[%s7] sm:$0xff]
    %v149 = vld [vmem:[%s7 + $0x8] sm:$0xff]
    %v150 = vld [vmem:[%s7 + $0x10] sm:$0xff]
    %v151 = vld [vmem:[%s7 + $0x18] sm:$0xff]
    %v152 = vld [vmem:[%s8] sm:$0x1]
    %v153 = vmax.f32 %v146, 0.0
    %v155 = vperm.slane %v152, 0
    %v158 = vsel %vm92, %v153, 0
    %160 = vmatpush.msra.mxu0 0.0
    %161 = vmatpush.msra.mxu0 0.0
    %162 = vmatpush.msra.mxu0 0.0
    %163 = vmatpush.msra.mxu0 0.0
    %164 = vmatpush.msra.mxu0 0.0
    %165 = vmatpush.msra.mxu0 0.0
    %166 = vmatpush.msra.mxu0 0.0
    %167 = vmatpush.msra.mxu0 0.0
    %168 = vmatpush.msra.mxu0 0.0
    %169 = vmatpush.msra.mxu0 0.0
    %170 = vmatpush.msra.mxu0 0.0
    %171 = vmatpush.msra.mxu0 0.0
    %172 = vmatpush.msra.mxu0 %v151
    %173 = vmatpush.msra.mxu0 %v150
    %174 = vmatpush.msra.mxu0 %v149
    %175 = vmatpush.msra.mxu0 %v148
    %176 = vmatmul.f32.gmra.mxu0 %v158
    %v177 = vpop.f32.mrf.mxu0
    %v178 = vadd.f32 %v155, %v177
    %179 = vdwg.mxu0
    %v180 = vsub.f32 %v49, %v178
    %v181 = vsub.f32 0.0, %v178
    %v182 = vmul.f32 %v181, 1.442695
    %v183 = vpow.pop %v182
    %185 = vrot.lane.b32.xlu0 %v183, 124
    %v186 = vpop.permute.xlu0 %185
    %v188 = vmul.f32 %v180, %v186
    %v189 = vsel %vm55, %v188, %v181
    %vm190 = vcmask 64512
    %191 = vst.msk [vmem:[#allocation5] sm:$0xff] %vm190, %v189
    // Predicated region
    $region42: #{tpu_custom_call.1} parent=1 // pred_check
      _
    $region43: #{tpu_custom_call.1} parent=1 // pred_check_branch
      %193 = sbr.rel (0) target = $region45
    $region44: #{tpu_custom_call.1} parent=1 // pred_region
      %195 = vsyncadd [#allocation4], 0
      %s197 = sshll.u32 [#allocation5], 4
      %s198 = int_to_ptr.vmem [resolvable:$true] %s197
      %s199 = sshll.u32 %s9, 4
      %s200 = int_to_ptr.hbm [resolvable:$true] %s199
      %202 = dma.vmem_to_hbm [thread:$0]  %s198, 128, %s200, [#allocation4]
    $region45: #{tpu_custom_call.1} parent=1 // pred_fallthru
      _
    // Predicated region
    $region46: #{tpu_custom_call.1} parent=1 // pred_check
      _
    $region47: #{tpu_custom_call.1} parent=1 // pred_check_branch
      %204 = sbr.rel (0) target = $region49
    $region48: #{tpu_custom_call.1} parent=1 // pred_region
      %206 = dma.done [#allocation4], 128
    $region49: #{tpu_custom_call.1} parent=1 // pred_fallthru
      _
    %207 = vsyncpa [#allocation3], 1
    %208 = vsyncpa [#allocation4], 1

</llo_original>
